<compile_context>
chip_gen: v7x
topology: tpu7x:2x2x1
jax: 0.10.0
libtpu: 0.0.40
codegen_flags: <defaults>
</compile_context>

<pallas_src>
import jax
import jax.numpy as jnp
from jax.experimental import pallas as pl
from jax.experimental.pallas import tpu as pltpu

_LANE = 128


def _round_up(n, m):
    return ((n + m - 1) // m) * m


def _cdiv(a, b):
    return -(-a // b)


def _vmem_capacity_bytes():
    try:
        return int(pltpu.get_tpu_info().vmem_capacity_bytes)
    except Exception:
        return 64 * 1024 * 1024  # conservative: v7x per-TensorCore VMEM


def _softplus(x):
    # PyTorch nn.Softplus(beta=1, threshold=20): x if x > 20 else log1p(exp(x)).
    # Single select; min() keeps exp from overflowing on the dead branch.
    return jnp.where(x > 20.0, x, jnp.log1p(jnp.exp(jnp.minimum(x, 20.0))))


def encoder_kernel(x_ref, w1_ref, b1_ref, wmv_ref, bmv_ref, out_ref, h_acc):
    k = pl.program_id(1)

    @pl.when(k == 0)
    def _():
        h_acc[...] = jnp.zeros_like(h_acc)

    # fc1 partial contraction over this K block (f32 accumulation on the MXU).
    h_acc[...] += jnp.dot(x_ref[...], w1_ref[...],
                          preferred_element_type=jnp.float32)

    @pl.when(k == pl.num_programs(1) - 1)
    def _():
        h = _softplus(h_acc[...] + b1_ref[...])
        # Fused fc3_mean | fc3_logvar: one wide, lane-dense matmul + store.
        out_ref[...] = (
            jnp.dot(h.astype(wmv_ref.dtype), wmv_ref[...],
                    preferred_element_type=jnp.float32)
            + bmv_ref[...]
        ).astype(out_ref.dtype)


def prepare_encoder_params(w1, b1, wm, bm, wv, bv, *, compute_dtype=jnp.float32):
    """One-time weight prep (call once, reuse across forward calls).

    Fuses [Wm|Wv] / [bm|bv], zero-pads feature dims to multiples of 128 and
    casts the MXU operands to `compute_dtype`. Keeping this out of the
    per-call path avoids re-materializing (K*H + H*N) elements every forward.
    Weights are (in_features, out_features); biases are (1, out_features).
    """
    input_dim, hidden_dim = w1.shape
    z_dim = wm.shape[1]
    K = _round_up(input_dim, _LANE)
    H = _round_up(hidden_dim, _LANE)
    N = _round_up(2 * z_dim, _LANE)

    wmv = jnp.concatenate([wm, wv], axis=1)      # (hidden, 2*z)
    bmv = jnp.concatenate([bm, bv], axis=1)      # (1, 2*z)

    # Padded hidden columns get softplus(0)=ln2 but multiply zeroed wmv rows,
    # so outputs are unaffected.
    w1_p = jnp.pad(w1, ((0, K - input_dim), (0, H - hidden_dim))).astype(compute_dtype)
    wmv_p = jnp.pad(wmv, ((0, H - hidden_dim), (0, N - 2 * z_dim))).astype(compute_dtype)
    b1_p = jnp.pad(b1, ((0, 0), (0, H - hidden_dim))).astype(jnp.float32)
    bmv_p = jnp.pad(bmv, ((0, 0), (0, N - 2 * z_dim))).astype(jnp.float32)

    return dict(w1=w1_p, b1=b1_p, wmv=wmv_p, bmv=bmv_p,
                input_dim=input_dim, hidden_dim=hidden_dim, z_dim=z_dim,
                K=K, H=H, N=N, compute_dtype=compute_dtype)


def encoder_forward(x, params, *, block_b=None, k_block=None):
    """x: (B, input_dim); params from prepare_encoder_params.
    Returns (mean, logvar), each (B, z_dim) float32."""
    w1_p, b1_p = params["w1"], params["b1"]
    wmv_p, bmv_p = params["wmv"], params["bmv"]
    K, H, N = params["K"], params["H"], params["N"]
    input_dim = params["input_dim"]
    hidden_dim = params["hidden_dim"]
    z_dim = params["z_dim"]
    compute_dtype = params["compute_dtype"]
    itemsize = jnp.dtype(compute_dtype).itemsize
    sublane = 16 if itemsize == 2 else 8   # bf16 native tile is (16, 128)

    B = x.shape[0]
    assert x.shape[1] == input_dim

    vmem_cap = _vmem_capacity_bytes()
    budget = int(0.8 * vmem_cap)

    # Default batch tile by generation: big tiles amortize the ~0.35us
    # per-grid-step overhead (128 MiB VMEM on v5e/v6e -> 1024; 64 MiB v7x -> 512).
    if block_b is None:
        block_b = 1024 if vmem_cap >= 96 * 1024 * 1024 else 512

    # Balanced batch tiles (padding capped at one sublane group instead of a
    # near-full extra tile); aim for >= 2 tiles so the "parallel" axis can
    # shard across v7x's two TensorCores.
    n_b = _cdiv(B, block_b)
    if n_b == 1 and B >= 2 * sublane:
        n_b = 2
    TB = _round_up(_cdiv(B, n_b), sublane)
    n_b = _cdiv(B, TB)
    Bp = n_b * TB

    def vmem_need(tb, tk, nk):
        w1_bufs = 1 if nk == 1 else 2
        return (2 * tb * tk * itemsize          # x tile, double buffered
                + w1_bufs * tk * H * itemsize    # w1 block(s)
                + H * N * itemsize               # [Wm|Wv], single resident copy
                + 4 * (H + N)                    # biases (f32)
                + 2 * tb * N * 4                 # output tile, double buffered
                + tb * H * 4)                    # f32 hidden accumulator

    # K block: biggest divisor of K (in lane units) whose footprint fits the
    # VMEM budget; nk > 1 streams w1 through a double-buffered (TK, H) window.
    m = K // _LANE
    lane_divs = [d * _LANE for d in range(m, 0, -1) if m % d == 0]
    if k_block is not None:
        cap = max(_LANE, (int(k_block) // _LANE) * _LANE)
        TK = max(d for d in lane_divs if d <= cap)
    else:
        TK = lane_divs[-1]
        for d in lane_divs:
            TK = d
            if vmem_need(TB, d, _cdiv(K, d)) <= budget:
                break
    # If even the smallest K block does not fit, shrink the batch tile.
    while vmem_need(TB, TK, _cdiv(K, TK)) > budget and TB > sublane:
        TB = max(sublane, _round_up(TB // 2, sublane))
        n_b = _cdiv(B, TB)
        Bp = n_b * TB
    nk = _cdiv(K, TK)

    # Per-call input prep (only x; weights were prepped once).
    x_p = x.astype(compute_dtype) if x.dtype != compute_dtype else x
    x_p = jnp.pad(x_p, ((0, Bp - B), (0, K - input_dim)))

    need = vmem_need(TB, TK, nk)
    vmem_limit = min(int(0.9 * vmem_cap), max(2 * need, 32 * 1024 * 1024))

    flops = 2 * B * (input_dim * hidden_dim + hidden_dim * 2 * z_dim)
    bytes_accessed = int(itemsize * (x.size + w1_p.size + wmv_p.size)
                         + 4 * (b1_p.size + bmv_p.size + B * 2 * z_dim))
    cost = pl.CostEstimate(flops=flops,
                           transcendentals=2 * B * hidden_dim,  # exp + log1p
                           bytes_accessed=bytes_accessed)

    def build(use_buffered):
        if use_buffered:
            # Grid-invariant blocks: single buffer halves their VMEM footprint.
            const_mode = pl.Buffered(1)
            w1_mode = pl.Buffered(1) if nk == 1 else None
        else:
            const_mode = None
            w1_mode = None
        grid_spec = pltpu.PrefetchScalarGridSpec(
            num_scalar_prefetch=0,
            grid=(n_b, nk),
            in_specs=[
                pl.BlockSpec((TB, TK), lambda i, k: (i, k)),                       # x tile
                pl.BlockSpec((TK, H), lambda i, k: (k, 0), pipeline_mode=w1_mode),  # w1 (streamed or resident)
                pl.BlockSpec((1, H), lambda i, k: (0, 0), pipeline_mode=const_mode),   # b1
                pl.BlockSpec((H, N), lambda i, k: (0, 0), pipeline_mode=const_mode),   # [Wm|Wv]
                pl.BlockSpec((1, N), lambda i, k: (0, 0), pipeline_mode=const_mode),   # [bm|bv]
            ],
            out_specs=pl.BlockSpec((TB, N), lambda i, k: (i, 0)),
            scratch_shapes=[pltpu.VMEM((TB, H), jnp.float32)],  # hidden accumulator
        )
        return pl.pallas_call(
            encoder_kernel,
            out_shape=jax.ShapeDtypeStruct((Bp, N), jnp.float32),
            grid_spec=grid_spec,
            compiler_params=pltpu.CompilerParams(
                dimension_semantics=("parallel", "arbitrary"),
                vmem_limit_bytes=vmem_limit,
            ),
            cost_estimate=cost,
        )

    try:
        out_p = build(True)(x_p, w1_p, b1_p, wmv_p, bmv_p)
    except Exception:
        # Fallback if pipeline_mode=Buffered(1) is unsupported in this JAX build.
        out_p = build(False)(x_p, w1_p, b1_p, wmv_p, bmv_p)

    out = out_p[:B, :2 * z_dim]
    return out[:, :z_dim], out[:, z_dim:]


def init_params(key, input_dim, hidden_dim, z_dim):
    """Deterministic init mimicking nn.Linear default (uniform +-1/sqrt(fan_in)).
    Weights stored as (in_features, out_features)."""
    def linear(k, fan_in, fan_out):
        kw, kb = jax.random.split(k)
        bound = 1.0 / jnp.sqrt(fan_in)
        w = jax.random.uniform(kw, (fan_in, fan_out), jnp.float32, -bound, bound)
        b = jax.random.uniform(kb, (1, fan_out), jnp.float32, -bound, bound)
        return w, b

    k1, k2, k3 = jax.random.split(key, 3)
    w1, b1 = linear(k1, input_dim, hidden_dim)
    wm, bm = linear(k2, hidden_dim, z_dim)
    wv, bv = linear(k3, hidden_dim, z_dim)
    return w1, b1, wm, bm, wv, bv


def reference_forward(x, w1, b1, wm, bm, wv, bv):
    h = jax.nn.softplus(x @ w1 + b1)
    return h @ wm + bm, h @ wv + bv


if __name__ == "__main__":
    key = jax.random.PRNGKey(0)
    kx, kp, kx2, kp2 = jax.random.split(key, 4)

    # --- case 1: small shapes, f32 MXU inputs, single K block / batch tile ---
    batch, input_dim, hidden_dim, z_dim = 8, 32, 64, 16
    x = jax.random.normal(kx, (batch, input_dim), jnp.float32)
    raw = init_params(kp, input_dim, hidden_dim, z_dim)
    ref_mean, ref_logvar = reference_forward(x, *raw)

    params_f32 = prepare_encoder_params(*raw, compute_dtype=jnp.float32)
    mean, logvar = encoder_forward(x, params_f32)
    jax.block_until_ready((mean, logvar))
    assert mean.shape == (batch, z_dim) and logvar.shape == (batch, z_dim)
    assert jnp.allclose(mean, ref_mean, atol=1e-5, rtol=1e-5)
    assert jnp.allclose(logvar, ref_logvar, atol=1e-5, rtol=1e-5)

    # --- case 2: bf16 MXU inputs (f32 accumulation + f32 softplus in-kernel) ---
    params_bf16 = prepare_encoder_params(*raw, compute_dtype=jnp.bfloat16)
    mean_b, logvar_b = encoder_forward(x, params_bf16)
    jax.block_until_ready((mean_b, logvar_b))
    assert jnp.allclose(mean_b, ref_mean, atol=3e-2, rtol=3e-2)
    assert jnp.allclose(logvar_b, ref_logvar, atol=3e-2, rtol=3e-2)

    # --- case 3: streamed-K weights + balanced multi-tile batch path ---
    batch2, input_dim2, hidden_dim2, z_dim2 = 40, 300, 192, 24
    x2 = jax.random.normal(kx2, (batch2, input_dim2), jnp.float32)
    raw2 = init_params(kp2, input_dim2, hidden_dim2, z_dim2)
    params2 = prepare_encoder_params(*raw2, compute_dtype=jnp.float32)
    mean2, logvar2 = encoder_forward(x2, params2, block_b=16, k_block=128)
    jax.block_until_ready((mean2, logvar2))
    ref_mean2, ref_logvar2 = reference_forward(x2, *raw2)
    assert mean2.shape == (batch2, z_dim2) and logvar2.shape == (batch2, z_dim2)
    assert jnp.allclose(mean2, ref_mean2, atol=1e-3, rtol=1e-3)
    assert jnp.allclose(logvar2, ref_logvar2, atol=1e-3, rtol=1e-3)

    print("KERNEL_OK")
</pallas_src>

<mosaic_0001>
module attributes {stable_mosaic.version = 11 : i64} {
  func.func @encoder_kernel(%arg0: i32, %arg1: i32, %arg2: memref<8x128xf32, #tpu.memory_space<vmem>>, %arg3: memref<128x128xf32, #tpu.memory_space<vmem>>, %arg4: memref<1x128xf32, #tpu.memory_space<vmem>>, %arg5: memref<128x128xf32, #tpu.memory_space<vmem>>, %arg6: memref<1x128xf32, #tpu.memory_space<vmem>>, %arg7: memref<8x128xf32, #tpu.memory_space<vmem>>, %arg8: memref<8x128xf32, #tpu.memory_space<vmem>>) attributes {dimension_semantics = [#tpu.dimension_semantics<parallel>, #tpu.dimension_semantics<arbitrary>], iteration_bounds = array<i64: 1, 1>, scalar_prefetch = 0 : i64, scratch_operands = 1 : i64, tpu.core_type = #tpu.core_type<tc>, window_params = [{transform_indices = @transform_0, window_bounds = array<i64: 8, 128>}, {pipeline_mode = #tpu.pipeline_mode<synchronous>, transform_indices = @transform_1, window_bounds = array<i64: 128, 128>}, {pipeline_mode = #tpu.pipeline_mode<synchronous>, transform_indices = @transform_2, window_bounds = array<i64: 1, 128>}, {pipeline_mode = #tpu.pipeline_mode<synchronous>, transform_indices = @transform_3, window_bounds = array<i64: 128, 128>}, {pipeline_mode = #tpu.pipeline_mode<synchronous>, transform_indices = @transform_4, window_bounds = array<i64: 1, 128>}, {transform_indices = @transform_5, window_bounds = array<i64: 8, 128>}]} {
    %c0_i32 = arith.constant 0 : i32
    %0 = arith.cmpi eq, %arg1, %c0_i32 : i32
    %1 = arith.extui %0 : i1 to i32
    %c0_i32_0 = arith.constant 0 : i32
    %2 = arith.cmpi ne, %1, %c0_i32_0 : i32
    scf.if %2 {
      %cst_10 = arith.constant 0.000000e+00 : f32
      %12 = vector.broadcast %cst_10 : f32 to vector<8x128xf32>
      %c0_11 = arith.constant 0 : index
      %c0_12 = arith.constant 0 : index
      %13 = vector.load %arg8[%c0_11, %c0_12] : memref<8x128xf32, #tpu.memory_space<vmem>>, vector<8x128xf32>
      tpu.vector_store %arg8[%c0_11, %c0_12], %12 {strides = array<i32>} : memref<8x128xf32, #tpu.memory_space<vmem>>, vector<8x128xf32>,
    } else {
    }
    %c0 = arith.constant 0 : index
    %c0_1 = arith.constant 0 : index
    %3 = vector.load %arg8[%c0, %c0_1] : memref<8x128xf32, #tpu.memory_space<vmem>>, vector<8x128xf32>
    %c0_2 = arith.constant 0 : index
    %c0_3 = arith.constant 0 : index
    %4 = vector.load %arg2[%c0_2, %c0_3] : memref<8x128xf32, #tpu.memory_space<vmem>>, vector<8x128xf32>
    %c0_4 = arith.constant 0 : index
    %c0_5 = arith.constant 0 : index
    %5 = vector.load %arg3[%c0_4, %c0_5] : memref<128x128xf32, #tpu.memory_space<vmem>>, vector<128x128xf32>
    %cst = arith.constant dense<0.000000e+00> : vector<8x128xf32>
    %6 = tpu.matmul %4, %5, %cst {dimension_numbers = #tpu.dot_dimension_numbers<[1], [0], [0], [1], [0, 0, 1, 1], [], []>} : vector<8x128xf32>, vector<128x128xf32>, vector<8x128xf32> -> vector<8x128xf32>
    %7 = arith.addf %3, %6 : vector<8x128xf32>
    %c0_6 = arith.constant 0 : index
    %c0_7 = arith.constant 0 : index
    %8 = vector.load %arg8[%c0_6, %c0_7] : memref<8x128xf32, #tpu.memory_space<vmem>>, vector<8x128xf32>
    tpu.vector_store %arg8[%c0_6, %c0_7], %7 {strides = array<i32>} : memref<8x128xf32, #tpu.memory_space<vmem>>, vector<8x128xf32>,
    %c0_i32_8 = arith.constant 0 : i32
    %9 = arith.cmpi eq, %arg1, %c0_i32_8 : i32
    %10 = arith.extui %9 : i1 to i32
    %c0_i32_9 = arith.constant 0 : i32
    %11 = arith.cmpi ne, %10, %c0_i32_9 : i32
    scf.if %11 {
      %c0_10 = arith.constant 0 : index
      %c0_11 = arith.constant 0 : index
      %12 = vector.load %arg8[%c0_10, %c0_11] : memref<8x128xf32, #tpu.memory_space<vmem>>, vector<8x128xf32>
      %c0_12 = arith.constant 0 : index
      %c0_13 = arith.constant 0 : index
      %13 = vector.load %arg4[%c0_12, %c0_13] : memref<1x128xf32, #tpu.memory_space<vmem>>, vector<1x128xf32>
      %14 = vector.broadcast %13 : vector<1x128xf32> to vector<8x128xf32>
      %15 = arith.addf %12, %14 : vector<8x128xf32>
      %cst_14 = arith.constant 2.000000e+01 : f32
      %16 = vector.broadcast %cst_14 : f32 to vector<8x128xf32>
      %17 = arith.cmpf ogt, %15, %16 : vector<8x128xf32>
      %cst_15 = arith.constant 2.000000e+01 : f32
      %18 = vector.broadcast %cst_15 : f32 to vector<8x128xf32>
      %19 = arith.minimumf %15, %18 : vector<8x128xf32>
      %20 = math.exp %19 : vector<8x128xf32>
      %21 = math.log1p %20 : vector<8x128xf32>
      %22 = arith.select %17, %15, %21 : vector<8x128xi1>, vector<8x128xf32>
      %c0_16 = arith.constant 0 : index
      %c0_17 = arith.constant 0 : index
      %23 = vector.load %arg5[%c0_16, %c0_17] : memref<128x128xf32, #tpu.memory_space<vmem>>, vector<128x128xf32>
      %cst_18 = arith.constant dense<0.000000e+00> : vector<8x128xf32>
      %24 = tpu.matmul %22, %23, %cst_18 {dimension_numbers = #tpu.dot_dimension_numbers<[1], [0], [0], [1], [0, 0, 1, 1], [], []>} : vector<8x128xf32>, vector<128x128xf32>, vector<8x128xf32> -> vector<8x128xf32>
      %c0_19 = arith.constant 0 : index
      %c0_20 = arith.constant 0 : index
      %25 = vector.load %arg6[%c0_19, %c0_20] : memref<1x128xf32, #tpu.memory_space<vmem>>, vector<1x128xf32>
      %26 = vector.broadcast %25 : vector<1x128xf32> to vector<8x128xf32>
      %27 = arith.addf %24, %26 : vector<8x128xf32>
      %c0_21 = arith.constant 0 : index
      %c0_22 = arith.constant 0 : index
      %28 = vector.load %arg7[%c0_21, %c0_22] : memref<8x128xf32, #tpu.memory_space<vmem>>, vector<8x128xf32>
      tpu.vector_store %arg7[%c0_21, %c0_22], %27 {strides = array<i32>} : memref<8x128xf32, #tpu.memory_space<vmem>>, vector<8x128xf32>,
    } else {
    }
    return
  }
  func.func @transform_0(%arg0: i32, %arg1: i32) -> (i32, i32) {
    %c0_i32 = arith.constant 0 : i32
    return %arg0, %arg1 : i32, i32
  }
  func.func @transform_1(%arg0: i32, %arg1: i32) -> (i32, i32) {
    %c0_i32 = arith.constant 0 : i32
    %c0_i32_0 = arith.constant 0 : i32
    return %arg1, %c0_i32 : i32, i32
  }
  func.func @transform_2(%arg0: i32, %arg1: i32) -> (i32, i32) {
    %c0_i32 = arith.constant 0 : i32
    %c0_i32_0 = arith.constant 0 : i32
    %c0_i32_1 = arith.constant 0 : i32
    return %c0_i32, %c0_i32_0 : i32, i32
  }
  func.func @transform_3(%arg0: i32, %arg1: i32) -> (i32, i32) {
    %c0_i32 = arith.constant 0 : i32
    %c0_i32_0 = arith.constant 0 : i32
    %c0_i32_1 = arith.constant 0 : i32
    return %c0_i32, %c0_i32_0 : i32, i32
  }
  func.func @transform_4(%arg0: i32, %arg1: i32) -> (i32, i32) {
    %c0_i32 = arith.constant 0 : i32
    %c0_i32_0 = arith.constant 0 : i32
    %c0_i32_1 = arith.constant 0 : i32
    return %c0_i32, %c0_i32_0 : i32, i32
  }
  func.func @transform_5(%arg0: i32, %arg1: i32) -> (i32, i32) {
    %c0_i32 = arith.constant 0 : i32
    %c0_i32_0 = arith.constant 0 : i32
    return %arg0, %c0_i32 : i32, i32
  }
}

module attributes {stable_mosaic.version = 11 : i64} {
  func.func @encoder_kernel(%arg0: i32, %arg1: i32, %arg2: memref<8x128xf32, #tpu.memory_space<vmem>>, %arg3: memref<128x128xf32, #tpu.memory_space<vmem>>, %arg4: memref<1x128xf32, #tpu.memory_space<vmem>>, %arg5: memref<128x128xf32, #tpu.memory_space<vmem>>, %arg6: memref<1x128xf32, #tpu.memory_space<vmem>>, %arg7: memref<8x128xf32, #tpu.memory_space<vmem>>, %arg8: memref<8x128xf32, #tpu.memory_space<vmem>>) attributes {dimension_semantics = [#tpu.dimension_semantics<parallel>, #tpu.dimension_semantics<arbitrary>], iteration_bounds = array<i64: 1, 1>, scalar_prefetch = 0 : i64, scratch_operands = 1 : i64, tpu.core_type = #tpu.core_type<tc>, window_params = [{transform_indices = @transform_0, window_bounds = array<i64: 8, 128>}, {transform_indices = @transform_1, window_bounds = array<i64: 128, 128>}, {pipeline_mode = #tpu.pipeline_mode<synchronous>, transform_indices = @transform_2, window_bounds = array<i64: 1, 128>}, {pipeline_mode = #tpu.pipeline_mode<synchronous>, transform_indices = @transform_3, window_bounds = array<i64: 128, 128>}, {pipeline_mode = #tpu.pipeline_mode<synchronous>, transform_indices = @transform_4, window_bounds = array<i64: 1, 128>}, {transform_indices = @transform_5, window_bounds = array<i64: 8, 128>}]} {
    %c0_i32 = arith.constant 0 : i32
    %0 = arith.cmpi eq, %arg1, %c0_i32 : i32
    %1 = arith.extui %0 : i1 to i32
    %c0_i32_0 = arith.constant 0 : i32
    %2 = arith.cmpi ne, %1, %c0_i32_0 : i32
    scf.if %2 {
      %cst_10 = arith.constant 0.000000e+00 : f32
      %12 = vector.broadcast %cst_10 : f32 to vector<8x128xf32>
      %c0_11 = arith.constant 0 : index
      %c0_12 = arith.constant 0 : index
      %13 = vector.load %arg8[%c0_11, %c0_12] : memref<8x128xf32, #tpu.memory_space<vmem>>, vector<8x128xf32>
      tpu.vector_store %arg8[%c0_11, %c0_12], %12 {strides = array<i32>} : memref<8x128xf32, #tpu.memory_space<vmem>>, vector<8x128xf32>,
    } else {
    }
    %c0 = arith.constant 0 : index
    %c0_1 = arith.constant 0 : index
    %3 = vector.load %arg8[%c0, %c0_1] : memref<8x128xf32, #tpu.memory_space<vmem>>, vector<8x128xf32>
    %c0_2 = arith.constant 0 : index
    %c0_3 = arith.constant 0 : index
    %4 = vector.load %arg2[%c0_2, %c0_3] : memref<8x128xf32, #tpu.memory_space<vmem>>, vector<8x128xf32>
    %c0_4 = arith.constant 0 : index
    %c0_5 = arith.constant 0 : index
    %5 = vector.load %arg3[%c0_4, %c0_5] : memref<128x128xf32, #tpu.memory_space<vmem>>, vector<128x128xf32>
    %cst = arith.constant dense<0.000000e+00> : vector<8x128xf32>
    %6 = tpu.matmul %4, %5, %cst {dimension_numbers = #tpu.dot_dimension_numbers<[1], [0], [0], [1], [0, 0, 1, 1], [], []>} : vector<8x128xf32>, vector<128x128xf32>, vector<8x128xf32> -> vector<8x128xf32>
    %7 = arith.addf %3, %6 : vector<8x128xf32>
    %c0_6 = arith.constant 0 : index
    %c0_7 = arith.constant 0 : index
    %8 = vector.load %arg8[%c0_6, %c0_7] : memref<8x128xf32, #tpu.memory_space<vmem>>, vector<8x128xf32>
    tpu.vector_store %arg8[%c0_6, %c0_7], %7 {strides = array<i32>} : memref<8x128xf32, #tpu.memory_space<vmem>>, vector<8x128xf32>,
    %c0_i32_8 = arith.constant 0 : i32
    %9 = arith.cmpi eq, %arg1, %c0_i32_8 : i32
    %10 = arith.extui %9 : i1 to i32
    %c0_i32_9 = arith.constant 0 : i32
    %11 = arith.cmpi ne, %10, %c0_i32_9 : i32
    scf.if %11 {
      %c0_10 = arith.constant 0 : index
      %c0_11 = arith.constant 0 : index
      %12 = vector.load %arg8[%c0_10, %c0_11] : memref<8x128xf32, #tpu.memory_space<vmem>>, vector<8x128xf32>
      %c0_12 = arith.constant 0 : index
      %c0_13 = arith.constant 0 : index
      %13 = vector.load %arg4[%c0_12, %c0_13] : memref<1x128xf32, #tpu.memory_space<vmem>>, vector<1x128xf32>
      %14 = vector.broadcast %13 : vector<1x128xf32> to vector<8x128xf32>
      %15 = arith.addf %12, %14 : vector<8x128xf32>
      %cst_14 = arith.constant 2.000000e+01 : f32
      %16 = vector.broadcast %cst_14 : f32 to vector<8x128xf32>
      %17 = arith.cmpf ogt, %15, %16 : vector<8x128xf32>
      %cst_15 = arith.constant 2.000000e+01 : f32
      %18 = vector.broadcast %cst_15 : f32 to vector<8x128xf32>
      %19 = arith.minimumf %15, %18 : vector<8x128xf32>
      %20 = math.exp %19 : vector<8x128xf32>
      %21 = math.log1p %20 : vector<8x128xf32>
      %22 = arith.select %17, %15, %21 : vector<8x128xi1>, vector<8x128xf32>
      %c0_16 = arith.constant 0 : index
      %c0_17 = arith.constant 0 : index
      %23 = vector.load %arg5[%c0_16, %c0_17] : memref<128x128xf32, #tpu.memory_space<vmem>>, vector<128x128xf32>
      %cst_18 = arith.constant dense<0.000000e+00> : vector<8x128xf32>
      %24 = tpu.matmul %22, %23, %cst_18 {dimension_numbers = #tpu.dot_dimension_numbers<[1], [0], [0], [1], [0, 0, 1, 1], [], []>} : vector<8x128xf32>, vector<128x128xf32>, vector<8x128xf32> -> vector<8x128xf32>
      %c0_19 = arith.constant 0 : index
      %c0_20 = arith.constant 0 : index
      %25 = vector.load %arg6[%c0_19, %c0_20] : memref<1x128xf32, #tpu.memory_space<vmem>>, vector<1x128xf32>
      %26 = vector.broadcast %25 : vector<1x128xf32> to vector<8x128xf32>
      %27 = arith.addf %24, %26 : vector<8x128xf32>
      %c0_21 = arith.constant 0 : index
      %c0_22 = arith.constant 0 : index
      %28 = vector.load %arg7[%c0_21, %c0_22] : memref<8x128xf32, #tpu.memory_space<vmem>>, vector<8x128xf32>
      tpu.vector_store %arg7[%c0_21, %c0_22], %27 {strides = array<i32>} : memref<8x128xf32, #tpu.memory_space<vmem>>, vector<8x128xf32>,
    } else {
    }
    return
  }
  func.func @transform_0(%arg0: i32, %arg1: i32) -> (i32, i32) {
    %c0_i32 = arith.constant 0 : i32
    return %arg0, %arg1 : i32, i32
  }
  func.func @transform_1(%arg0: i32, %arg1: i32) -> (i32, i32) {
    %c0_i32 = arith.constant 0 : i32
    %c0_i32_0 = arith.constant 0 : i32
    return %arg1, %c0_i32 : i32, i32
  }
  func.func @transform_2(%arg0: i32, %arg1: i32) -> (i32, i32) {
    %c0_i32 = arith.constant 0 : i32
    %c0_i32_0 = arith.constant 0 : i32
    %c0_i32_1 = arith.constant 0 : i32
    return %c0_i32, %c0_i32_0 : i32, i32
  }
  func.func @transform_3(%arg0: i32, %arg1: i32) -> (i32, i32) {
    %c0_i32 = arith.constant 0 : i32
    %c0_i32_0 = arith.constant 0 : i32
    %c0_i32_1 = arith.constant 0 : i32
    return %c0_i32, %c0_i32_0 : i32, i32
  }
  func.func @transform_4(%arg0: i32, %arg1: i32) -> (i32, i32) {
    %c0_i32 = arith.constant 0 : i32
    %c0_i32_0 = arith.constant 0 : i32
    %c0_i32_1 = arith.constant 0 : i32
    return %c0_i32, %c0_i32_0 : i32, i32
  }
  func.func @transform_5(%arg0: i32, %arg1: i32) -> (i32, i32) {
    %c0_i32 = arith.constant 0 : i32
    %c0_i32_0 = arith.constant 0 : i32
    return %arg0, %c0_i32 : i32, i32
  }
}

</mosaic_0001>

<llo_original>
// kernel: tpu_custom_call.1
$region0: #{tpu_custom_call.1}
  #allocation0 [shape = 'u32[]', space=smem, size = 0x4, offset = 0x4, fixed_abs, tag = 'smem constant byte address 0x4 - core index']
  #allocation1 [shape = 'u32[144,128]{1,0:T(1,128)}', space=vmem, size = 0x12000, scoped, tag = 'internal scratch']
  #allocation2 [shape = 'f32[8,128]{1,0:T(8,128)}', space=vmem, size = 0x1000, scoped, tag = 'scratch operand']
  %s0 = inlined_call_operand.hbm [shape: f32[8,128], index: 0, kind: input, shape index: {}]
  %s1 = inlined_call_operand.hbm [shape: f32[128,128], index: 1, kind: input, shape index: {}]
  %s2 = inlined_call_operand.vmem [shape: f32[1,128], index: 2, kind: input, shape index: {}]
  %s3 = inlined_call_operand.hbm [shape: f32[128,128], index: 3, kind: input, shape index: {}]
  %s4 = inlined_call_operand.vmem [shape: f32[1,128], index: 4, kind: input, shape index: {}]
  %s5 = inlined_call_operand.hbm [shape: f32[8,128], index: 5, kind: output, shape index: {}]
  %s6 = sld [smem:[#allocation0]]
  $region50: #{tpu_custom_call.1} parent=0
    _
  %s8 = ssub.s32 1, %s6
  %s9 = scalar_select 0, %s8, %s6
  $region1: #{tpu_custom_call.1} parent=0
    #allocation3 [shape = 'u8[4096]{0}', space=vmem, size = 0x1000, scoped, tag = 'input window, operand 0, single buffered']
    #allocation4 [shape = 's32[1]{0}', space=sflag, size = 0x4, scoped, tag = 'scoped memory for tpu_custom_call.1']
    #allocation5 [shape = 's32[1]{0}', space=sflag, size = 0x4, scoped, tag = 'scoped memory for tpu_custom_call.1']
    #allocation6 [shape = 'u8[65536]{0}', space=vmem, size = 0x10000, scoped, tag = 'input window, operand 1, single buffered']
    #allocation7 [shape = 's32[1]{0}', space=sflag, size = 0x4, scoped, tag = 'scoped memory for tpu_custom_call.1']
    #allocation8 [shape = 'u8[65536]{0}', space=vmem, size = 0x10000, scoped, tag = 'input window, operand 3, single buffered']
    #allocation9 [shape = 'u8[4096]{0}', space=vmem, size = 0x1000, scoped, tag = 'output window, operand 0, single buffered']
    %10 = vsyncpa [#allocation4], 0
    %11 = vsyncpa [#allocation7], 0
    %12 = vsyncpa [#allocation5], 0
    // Predicated region
    $region2: #{tpu_custom_call.1} parent=1 // pred_check
      _
    $region3: #{tpu_custom_call.1} parent=1 // pred_check_branch
      %14 = sbr.rel (0) target = $region5
    $region4: #{tpu_custom_call.1} parent=1 // pred_region
      %s16 = ssub.s32 128, 128
      %17 = vsyncadd [#allocation4], %s16
      %s19 = sshll.u32 [#allocation3], 4
      %s20 = int_to_ptr.vmem [resolvable:$true] %s19
      %22 = dma.hbm_to_vmem [thread:$0]  %s0, 128, %s20, [#allocation4]
    $region5: #{tpu_custom_call.1} parent=1 // pred_fallthru
      _
    // Predicated region
    $region6: #{tpu_custom_call.1} parent=1 // pred_check
      _
    $region7: #{tpu_custom_call.1} parent=1 // pred_check_branch
      %24 = sbr.rel (0) target = $region9
    $region8: #{tpu_custom_call.1} parent=1 // pred_region
      %s26 = ssub.s32 2048, 2048
      %27 = vsyncadd [#allocation7], %s26
      %s28 = sshll.u32 [#allocation6], 4
      %s29 = int_to_ptr.vmem [resolvable:$true] %s28
      %34 = dma.hbm_to_vmem [thread:$0]  %s1, 2048, %s29, [#allocation7], 128, 128, 8
    $region9: #{tpu_custom_call.1} parent=1 // pred_fallthru
      _
    // Predicated region
    $region10: #{tpu_custom_call.1} parent=1 // pred_check
      _
    $region11: #{tpu_custom_call.1} parent=1 // pred_check_branch
      %36 = sbr.rel (0) target = $region13
    $region12: #{tpu_custom_call.1} parent=1 // pred_region
      _
    $region13: #{tpu_custom_call.1} parent=1 // pred_fallthru
      _
    // Predicated region
    $region14: #{tpu_custom_call.1} parent=1 // pred_check
      _
    $region15: #{tpu_custom_call.1} parent=1 // pred_check_branch
      %38 = sbr.rel (0) target = $region17
    $region16: #{tpu_custom_call.1} parent=1 // pred_region
      %s40 = ssub.s32 2048, 2048
      %41 = vsyncadd [#allocation7], %s40
      %s42 = sshll.u32 [#allocation8], 4
      %s43 = int_to_ptr.vmem [resolvable:$true] %s42
      %48 = dma.hbm_to_vmem [thread:$0]  %s3, 2048, %s43, [#allocation7], 128, 128, 8
    $region17: #{tpu_custom_call.1} parent=1 // pred_fallthru
      _
    // Predicated region
    $region18: #{tpu_custom_call.1} parent=1 // pred_check
      _
    $region19: #{tpu_custom_call.1} parent=1 // pred_check_branch
      %50 = sbr.rel (0) target = $region21
    $region20: #{tpu_custom_call.1} parent=1 // pred_region
      _
    $region21: #{tpu_custom_call.1} parent=1 // pred_fallthru
      _
    // Predicated region
    $region22: #{tpu_custom_call.1} parent=1 // pred_check
      _
    $region23: #{tpu_custom_call.1} parent=1 // pred_check_branch
      %52 = sbr.rel (0) target = $region25
    $region24: #{tpu_custom_call.1} parent=1 // pred_region
      %53 = dma.done [#allocation4], 128
    $region25: #{tpu_custom_call.1} parent=1 // pred_fallthru
      _
    // Predicated region
    $region26: #{tpu_custom_call.1} parent=1 // pred_check
      _
    $region27: #{tpu_custom_call.1} parent=1 // pred_check_branch
      %55 = sbr.rel (0) target = $region29
    $region28: #{tpu_custom_call.1} parent=1 // pred_region
      %56 = dma.done [#allocation7], 2048
    $region29: #{tpu_custom_call.1} parent=1 // pred_fallthru
      _
    // Predicated region
    $region30: #{tpu_custom_call.1} parent=1 // pred_check
      _
    $region31: #{tpu_custom_call.1} parent=1 // pred_check_branch
      %58 = sbr.rel (0) target = $region33
    $region32: #{tpu_custom_call.1} parent=1 // pred_region
      %59 = dma.done [#allocation7], 2048
    $region33: #{tpu_custom_call.1} parent=1 // pred_fallthru
      _
    %p60 = scmp.eq.s32.totalorder 0, 0
    // Predicated region
    $region34: #{tpu_custom_call.1} parent=1 // pred_check
      %p61 = pneg %p60
    $region35: #{tpu_custom_call.1} parent=1 // pred_check_branch
      %63 = sbr.rel (%p61) target = $region37
    $region36: #{tpu_custom_call.1} parent=1 // pred_region
      %64 = vst [vmem:[#allocation2] sm:$0xff] 0.0
    $region37: #{tpu_custom_call.1} parent=1 // pred_fallthru
      _
    %v65 = vld [vmem:[#allocation2] sm:$0xff]
    %v66 = vld [vmem:[#allocation3] sm:$0xff]
    %v67 = vld [vmem:[#allocation6] sm:$0xff]
    %v68 = vld [vmem:[#allocation6 + $0x8] sm:$0xff]
    %v69 = vld [vmem:[#allocation6 + $0x10] sm:$0xff]
    %v70 = vld [vmem:[#allocation6 + $0x18] sm:$0xff]
    %v71 = vld [vmem:[#allocation6 + $0x20] sm:$0xff]
    %v72 = vld [vmem:[#allocation6 + $0x28] sm:$0xff]
    %v73 = vld [vmem:[#allocation6 + $0x30] sm:$0xff]
    %v74 = vld [vmem:[#allocation6 + $0x38] sm:$0xff]
    %v75 = vld [vmem:[#allocation6 + $0x40] sm:$0xff]
    %v76 = vld [vmem:[#allocation6 + $0x48] sm:$0xff]
    %v77 = vld [vmem:[#allocation6 + $0x50] sm:$0xff]
    %v78 = vld [vmem:[#allocation6 + $0x58] sm:$0xff]
    %v79 = vld [vmem:[#allocation6 + $0x60] sm:$0xff]
    %v80 = vld [vmem:[#allocation6 + $0x68] sm:$0xff]
    %v81 = vld [vmem:[#allocation6 + $0x70] sm:$0xff]
    %v82 = vld [vmem:[#allocation6 + $0x78] sm:$0xff]
    %83 = vmatprep.subr.mxu0 0.0
    %84 = vmatpush1.msra.mxu0 %v67
    %85 = vmatprep.subr.mxu0 0.0
    %86 = vmatpush1.msra.mxu0 %v68
    %87 = vmatprep.subr.mxu0 0.0
    %88 = vmatpush1.msra.mxu0 %v69
    %89 = vmatprep.subr.mxu0 0.0
    %90 = vmatpush1.msra.mxu0 %v70
    %91 = vmatprep.subr.mxu0 0.0
    %92 = vmatpush1.msra.mxu0 %v71
    %93 = vmatprep.subr.mxu0 0.0
    %94 = vmatpush1.msra.mxu0 %v72
    %95 = vmatprep.subr.mxu0 0.0
    %96 = vmatpush1.msra.mxu0 %v73
    %97 = vmatprep.subr.mxu0 0.0
    %98 = vmatpush1.msra.mxu0 %v74
    %99 = vmatprep.subr.mxu0 0.0
    %100 = vmatpush1.msra.mxu0 %v75
    %101 = vmatprep.subr.mxu0 0.0
    %102 = vmatpush1.msra.mxu0 %v76
    %103 = vmatprep.subr.mxu0 0.0
    %104 = vmatpush1.msra.mxu0 %v77
    %105 = vmatprep.subr.mxu0 0.0
    %106 = vmatpush1.msra.mxu0 %v78
    %107 = vmatprep.subr.mxu0 0.0
    %108 = vmatpush1.msra.mxu0 %v79
    %109 = vmatprep.subr.mxu0 0.0
    %110 = vmatpush1.msra.mxu0 %v80
    %111 = vmatprep.subr.mxu0 0.0
    %112 = vmatpush1.msra.mxu0 %v81
    %113 = vmatprep.subr.mxu0 0.0
    %114 = vmatpush1.msra.mxu0 %v82
    %115 = vmatprep.subr.mxu0 0.0
    %116 = vmatpush1.msra.mxu0 0.0
    %117 = vmatprep.subr.mxu0 0.0
    %118 = vmatpush1.msra.mxu0 0.0
    %119 = vmatprep.subr.mxu0 0.0
    %120 = vmatpush1.msra.mxu0 0.0
    %121 = vmatprep.subr.mxu0 0.0
    %122 = vmatpush1.msra.mxu0 0.0
    %123 = vmatprep.subr.mxu0 0.0
    %124 = vmatpush1.msra.mxu0 0.0
    %125 = vmatprep.subr.mxu0 0.0
    %126 = vmatpush1.msra.mxu0 0.0
    %127 = vmatprep.subr.mxu0 0.0
    %128 = vmatpush1.msra.mxu0 0.0
    %129 = vmatprep.subr.mxu0 0.0
    %130 = vmatpush1.msra.mxu0 0.0
    %131 = vmatprep.subr.mxu0 0.0
    %132 = vmatpush1.msra.mxu0 0.0
    %133 = vmatprep.subr.mxu0 0.0
    %134 = vmatpush1.msra.mxu0 0.0
    %135 = vmatprep.subr.mxu0 0.0
    %136 = vmatpush1.msra.mxu0 0.0
    %137 = vmatprep.subr.mxu0 0.0
    %138 = vmatpush1.msra.mxu0 0.0
    %139 = vmatprep.subr.mxu0 0.0
    %140 = vmatpush1.msra.mxu0 0.0
    %141 = vmatprep.subr.mxu0 0.0
    %142 = vmatpush1.msra.mxu0 0.0
    %143 = vmatprep.subr.mxu0 0.0
    %144 = vmatpush1.msra.mxu0 0.0
    %145 = vmatprep.subr.mxu0 0.0
    %146 = vmatpush1.msra.mxu0 0.0
    %147 = vmatprep.mubr.f32.mxu0 0.0
    %148 = vmatmul.mubr.f32.gmra.mrb[0].mxu0 %v66
    %v149 = vpop.f32.mrb[0].mxu0
    %v150 = vadd.f32 0.0, %v149
    %v151 = vpop.f32.mrb[0].mxu0
    %152 = vdwg.mxu0
    %v153 = vadd.f32 %v65, %v150
    %154 = vst [vmem:[#allocation2] sm:$0xff] %v153
    // Predicated region
    $region38: #{tpu_custom_call.1} parent=1 // pred_check
      %p155 = pneg %p60
    $region39: #{tpu_custom_call.1} parent=1 // pred_check_branch
      %157 = sbr.rel (%p155) target = $region41
    $region40: #{tpu_custom_call.1} parent=1 // pred_region
      %v158 = vld [vmem:[#allocation2] sm:$0xff]
      %v159 = vld [vmem:[%s2] sm:$0x1]
      %v161 = vlaneseq
      %v162 = vshrl.u32 %v161, 7
      %v163 = vsub.s32 0, %v162
      %v164 = vrot.slane %v159, %v163
      %v166 = vadd.f32 %v158, %v164
      %vm167 = vcmp.gt.f32.partialorder %v166, 20.0
      %v168 = vmin.f32 %v166, 20.0
      %v169 = vmul.f32 %v168, 1.442695
      %v170 = vpow.pop %v169
      %v171 = vadd.f32 %v170, 1.0
      %v172 = vlog2.pop %v171
      %v173 = vmul.f32 %v172, 0.6931472
      %v174 = vmul.f32 -0.5, %v170
      %v175 = vadd.f32 %v174, 1.0
      %v176 = vmul.f32 %v175, %v170
      %v177 = vand.u32 2147483647, %v170
      %vm178 = vcmp.lt.f32.partialorder %v177, 0.0004427343
      %v179 = vsel %vm178, %v176, %v173
      %v180 = vsel %vm167, %v166, %v179
      %v181 = vld [vmem:[#allocation8] sm:$0xff]
      %v182 = vld [vmem:[#allocation8 + $0x8] sm:$0xff]
      %v183 = vld [vmem:[#allocation8 + $0x10] sm:$0xff]
      %v184 = vld [vmem:[#allocation8 + $0x18] sm:$0xff]
      %v185 = vld [vmem:[#allocation8 + $0x20] sm:$0xff]
      %v186 = vld [vmem:[#allocation8 + $0x28] sm:$0xff]
      %v187 = vld [vmem:[#allocation8 + $0x30] sm:$0xff]
      %v188 = vld [vmem:[#allocation8 + $0x38] sm:$0xff]
      %v189 = vld [vmem:[#allocation8 + $0x40] sm:$0xff]
      %v190 = vld [vmem:[#allocation8 + $0x48] sm:$0xff]
      %v191 = vld [vmem:[#allocation8 + $0x50] sm:$0xff]
      %v192 = vld [vmem:[#allocation8 + $0x58] sm:$0xff]
      %v193 = vld [vmem:[#allocation8 + $0x60] sm:$0xff]
      %v194 = vld [vmem:[#allocation8 + $0x68] sm:$0xff]
      %v195 = vld [vmem:[#allocation8 + $0x70] sm:$0xff]
      %v196 = vld [vmem:[#allocation8 + $0x78] sm:$0xff]
      %v197 = vld [vmem:[%s4] sm:$0x1]
      %v199 = vlaneseq
      %v200 = vshrl.u32 %v199, 7
      %v201 = vsub.s32 0, %v200
      %v202 = vrot.slane %v197, %v201
      %204 = vmatprep.subr.mxu0 0.0
      %205 = vmatpush1.msra.mxu0 %v181
      %206 = vmatprep.subr.mxu0 0.0
      %207 = vmatpush1.msra.mxu0 %v182
      %208 = vmatprep.subr.mxu0 0.0
      %209 = vmatpush1.msra.mxu0 %v183
      %210 = vmatprep.subr.mxu0 0.0
      %211 = vmatpush1.msra.mxu0 %v184
      %212 = vmatprep.subr.mxu0 0.0
      %213 = vmatpush1.msra.mxu0 %v185
      %214 = vmatprep.subr.mxu0 0.0
      %215 = vmatpush1.msra.mxu0 %v186
      %216 = vmatprep.subr.mxu0 0.0
      %217 = vmatpush1.msra.mxu0 %v187
      %218 = vmatprep.subr.mxu0 0.0
      %219 = vmatpush1.msra.mxu0 %v188
      %220 = vmatprep.subr.mxu0 0.0
      %221 = vmatpush1.msra.mxu0 %v189
      %222 = vmatprep.subr.mxu0 0.0
      %223 = vmatpush1.msra.mxu0 %v190
      %224 = vmatprep.subr.mxu0 0.0
      %225 = vmatpush1.msra.mxu0 %v191
      %226 = vmatprep.subr.mxu0 0.0
      %227 = vmatpush1.msra.mxu0 %v192
      %228 = vmatprep.subr.mxu0 0.0
      %229 = vmatpush1.msra.mxu0 %v193
      %230 = vmatprep.subr.mxu0 0.0
      %231 = vmatpush1.msra.mxu0 %v194
      %232 = vmatprep.subr.mxu0 0.0
      %233 = vmatpush1.msra.mxu0 %v195
      %234 = vmatprep.subr.mxu0 0.0
      %235 = vmatpush1.msra.mxu0 %v196
      %236 = vmatprep.subr.mxu0 0.0
      %237 = vmatpush1.msra.mxu0 0.0
      %238 = vmatprep.subr.mxu0 0.0
      %239 = vmatpush1.msra.mxu0 0.0
      %240 = vmatprep.subr.mxu0 0.0
      %241 = vmatpush1.msra.mxu0 0.0
      %242 = vmatprep.subr.mxu0 0.0
      %243 = vmatpush1.msra.mxu0 0.0
      %244 = vmatprep.subr.mxu0 0.0
      %245 = vmatpush1.msra.mxu0 0.0
      %246 = vmatprep.subr.mxu0 0.0
      %247 = vmatpush1.msra.mxu0 0.0
      %248 = vmatprep.subr.mxu0 0.0
      %249 = vmatpush1.msra.mxu0 0.0
      %250 = vmatprep.subr.mxu0 0.0
      %251 = vmatpush1.msra.mxu0 0.0
      %252 = vmatprep.subr.mxu0 0.0
      %253 = vmatpush1.msra.mxu0 0.0
      %254 = vmatprep.subr.mxu0 0.0
      %255 = vmatpush1.msra.mxu0 0.0
      %256 = vmatprep.subr.mxu0 0.0
      %257 = vmatpush1.msra.mxu0 0.0
      %258 = vmatprep.subr.mxu0 0.0
      %259 = vmatpush1.msra.mxu0 0.0
      %260 = vmatprep.subr.mxu0 0.0
      %261 = vmatpush1.msra.mxu0 0.0
      %262 = vmatprep.subr.mxu0 0.0
      %263 = vmatpush1.msra.mxu0 0.0
      %264 = vmatprep.subr.mxu0 0.0
      %265 = vmatpush1.msra.mxu0 0.0
      %266 = vmatprep.subr.mxu0 0.0
      %267 = vmatpush1.msra.mxu0 0.0
      %268 = vmatprep.mubr.f32.mxu0 0.0
      %269 = vmatmul.mubr.f32.gmra.mrb[0].mxu0 %v180
      %v270 = vpop.f32.mrb[0].mxu0
      %v271 = vadd.f32 %v202, %v270
      %v272 = vpop.f32.mrb[0].mxu0
      %273 = vdwg.mxu0
      %274 = vst [vmem:[#allocation9] sm:$0xff] %v271
    $region41: #{tpu_custom_call.1} parent=1 // pred_fallthru
      _
    // Predicated region
    $region42: #{tpu_custom_call.1} parent=1 // pred_check
      _
    $region43: #{tpu_custom_call.1} parent=1 // pred_check_branch
      %276 = sbr.rel (0) target = $region45
    $region44: #{tpu_custom_call.1} parent=1 // pred_region
      %s278 = ssub.s32 128, 128
      %279 = vsyncadd [#allocation5], %s278
      %s281 = sshll.u32 [#allocation9], 4
      %s282 = int_to_ptr.vmem [resolvable:$true] %s281
      %284 = dma.vmem_to_hbm [thread:$0]  %s282, 128, %s5, [#allocation5]
    $region45: #{tpu_custom_call.1} parent=1 // pred_fallthru
      _
    // Predicated region
    $region46: #{tpu_custom_call.1} parent=1 // pred_check
      _
    $region47: #{tpu_custom_call.1} parent=1 // pred_check_branch
      %286 = sbr.rel (0) target = $region49
    $region48: #{tpu_custom_call.1} parent=1 // pred_region
      %287 = dma.done [#allocation5], 128
    $region49: #{tpu_custom_call.1} parent=1 // pred_fallthru
      _
    %288 = vsyncpa [#allocation4], 1
    %289 = vsyncpa [#allocation7], 1
    %290 = vsyncpa [#allocation5], 1

// kernel: tpu_custom_call.1
$region0: #{tpu_custom_call.1}
  #allocation0 [shape = 'u32[]', space=smem, size = 0x4, offset = 0x4, fixed_abs, tag = 'smem constant byte address 0x4 - core index']
  #allocation1 [shape = 'u32[144,128]{1,0:T(1,128)}', space=vmem, size = 0x12000, scoped, tag = 'internal scratch']
  #allocation2 [shape = 'f32[8,128]{1,0:T(8,128)}', space=vmem, size = 0x1000, scoped, tag = 'scratch operand']
  %s0 = inlined_call_operand.hbm [shape: f32[8,128], index: 0, kind: input, shape index: {}]
  %s1 = inlined_call_operand.hbm [shape: f32[128,128], index: 1, kind: input, shape index: {}]
  %s2 = inlined_call_operand.vmem [shape: f32[1,128], index: 2, kind: input, shape index: {}]
  %s3 = inlined_call_operand.hbm [shape: f32[128,128], index: 3, kind: input, shape index: {}]
  %s4 = inlined_call_operand.vmem [shape: f32[1,128], index: 4, kind: input, shape index: {}]
  %s5 = inlined_call_operand.hbm [shape: f32[8,128], index: 5, kind: output, shape index: {}]
  %s6 = sld [smem:[#allocation0]]
  $region50: #{tpu_custom_call.1} parent=0
    _
  %s8 = ssub.s32 1, %s6
  %s9 = scalar_select 0, %s8, %s6
  $region1: #{tpu_custom_call.1} parent=0
    #allocation3 [shape = 'u8[4096]{0}', space=vmem, size = 0x1000, scoped, tag = 'input window, operand 0, single buffered']
    #allocation4 [shape = 's32[1]{0}', space=sflag, size = 0x4, scoped, tag = 'scoped memory for tpu_custom_call.1']
    #allocation5 [shape = 's32[1]{0}', space=sflag, size = 0x4, scoped, tag = 'scoped memory for tpu_custom_call.1']
    #allocation6 [shape = 'u8[65536]{0}', space=vmem, size = 0x10000, scoped, tag = 'input window, operand 1, single buffered']
    #allocation7 [shape = 's32[1]{0}', space=sflag, size = 0x4, scoped, tag = 'scoped memory for tpu_custom_call.1']
    #allocation8 [shape = 'u8[65536]{0}', space=vmem, size = 0x10000, scoped, tag = 'input window, operand 3, single buffered']
    #allocation9 [shape = 'u8[4096]{0}', space=vmem, size = 0x1000, scoped, tag = 'output window, operand 0, single buffered']
    %10 = vsyncpa [#allocation4], 0
    %11 = vsyncpa [#allocation7], 0
    %12 = vsyncpa [#allocation5], 0
    // Predicated region
    $region2: #{tpu_custom_call.1} parent=1 // pred_check
      _
    $region3: #{tpu_custom_call.1} parent=1 // pred_check_branch
      %14 = sbr.rel (0) target = $region5
    $region4: #{tpu_custom_call.1} parent=1 // pred_region
      %s16 = ssub.s32 128, 128
      %17 = vsyncadd [#allocation4], %s16
      %s19 = sshll.u32 [#allocation3], 4
      %s20 = int_to_ptr.vmem [resolvable:$true] %s19
      %22 = dma.hbm_to_vmem [thread:$0]  %s0, 128, %s20, [#allocation4]
    $region5: #{tpu_custom_call.1} parent=1 // pred_fallthru
      _
    // Predicated region
    $region6: #{tpu_custom_call.1} parent=1 // pred_check
      _
    $region7: #{tpu_custom_call.1} parent=1 // pred_check_branch
      %24 = sbr.rel (0) target = $region9
    $region8: #{tpu_custom_call.1} parent=1 // pred_region
      %s26 = ssub.s32 2048, 2048
      %27 = vsyncadd [#allocation7], %s26
      %s28 = sshll.u32 [#allocation6], 4
      %s29 = int_to_ptr.vmem [resolvable:$true] %s28
      %34 = dma.hbm_to_vmem [thread:$0]  %s1, 2048, %s29, [#allocation7], 128, 128, 8
    $region9: #{tpu_custom_call.1} parent=1 // pred_fallthru
      _
    // Predicated region
    $region10: #{tpu_custom_call.1} parent=1 // pred_check
      _
    $region11: #{tpu_custom_call.1} parent=1 // pred_check_branch
      %36 = sbr.rel (0) target = $region13
    $region12: #{tpu_custom_call.1} parent=1 // pred_region
      _
    $region13: #{tpu_custom_call.1} parent=1 // pred_fallthru
      _
    // Predicated region
    $region14: #{tpu_custom_call.1} parent=1 // pred_check
      _
    $region15: #{tpu_custom_call.1} parent=1 // pred_check_branch
      %38 = sbr.rel (0) target = $region17
    $region16: #{tpu_custom_call.1} parent=1 // pred_region
      %s40 = ssub.s32 2048, 2048
      %41 = vsyncadd [#allocation7], %s40
      %s42 = sshll.u32 [#allocation8], 4
      %s43 = int_to_ptr.vmem [resolvable:$true] %s42
      %48 = dma.hbm_to_vmem [thread:$0]  %s3, 2048, %s43, [#allocation7], 128, 128, 8
    $region17: #{tpu_custom_call.1} parent=1 // pred_fallthru
      _
    // Predicated region
    $region18: #{tpu_custom_call.1} parent=1 // pred_check
      _
    $region19: #{tpu_custom_call.1} parent=1 // pred_check_branch
      %50 = sbr.rel (0) target = $region21
    $region20: #{tpu_custom_call.1} parent=1 // pred_region
      _
    $region21: #{tpu_custom_call.1} parent=1 // pred_fallthru
      _
    // Predicated region
    $region22: #{tpu_custom_call.1} parent=1 // pred_check
      _
    $region23: #{tpu_custom_call.1} parent=1 // pred_check_branch
      %52 = sbr.rel (0) target = $region25
    $region24: #{tpu_custom_call.1} parent=1 // pred_region
      %53 = dma.done [#allocation4], 128
    $region25: #{tpu_custom_call.1} parent=1 // pred_fallthru
      _
    // Predicated region
    $region26: #{tpu_custom_call.1} parent=1 // pred_check
      _
    $region27: #{tpu_custom_call.1} parent=1 // pred_check_branch
      %55 = sbr.rel (0) target = $region29
    $region28: #{tpu_custom_call.1} parent=1 // pred_region
      %56 = dma.done [#allocation7], 2048
    $region29: #{tpu_custom_call.1} parent=1 // pred_fallthru
      _
    // Predicated region
    $region30: #{tpu_custom_call.1} parent=1 // pred_check
      _
    $region31: #{tpu_custom_call.1} parent=1 // pred_check_branch
      %58 = sbr.rel (0) target = $region33
    $region32: #{tpu_custom_call.1} parent=1 // pred_region
      %59 = dma.done [#allocation7], 2048
    $region33: #{tpu_custom_call.1} parent=1 // pred_fallthru
      _
    %p60 = scmp.eq.s32.totalorder 0, 0
    // Predicated region
    $region34: #{tpu_custom_call.1} parent=1 // pred_check
      %p61 = pneg %p60
    $region35: #{tpu_custom_call.1} parent=1 // pred_check_branch
      %63 = sbr.rel (%p61) target = $region37
    $region36: #{tpu_custom_call.1} parent=1 // pred_region
      %64 = vst [vmem:[#allocation2] sm:$0xff] 0.0
    $region37: #{tpu_custom_call.1} parent=1 // pred_fallthru
      _
    %v65 = vld [vmem:[#allocation2] sm:$0xff]
    %v66 = vld [vmem:[#allocation3] sm:$0xff]
    %v67 = vld [vmem:[#allocation6] sm:$0xff]
    %v68 = vld [vmem:[#allocation6 + $0x8] sm:$0xff]
    %v69 = vld [vmem:[#allocation6 + $0x10] sm:$0xff]
    %v70 = vld [vmem:[#allocation6 + $0x18] sm:$0xff]
    %v71 = vld [vmem:[#allocation6 + $0x20] sm:$0xff]
    %v72 = vld [vmem:[#allocation6 + $0x28] sm:$0xff]
    %v73 = vld [vmem:[#allocation6 + $0x30] sm:$0xff]
    %v74 = vld [vmem:[#allocation6 + $0x38] sm:$0xff]
    %v75 = vld [vmem:[#allocation6 + $0x40] sm:$0xff]
    %v76 = vld [vmem:[#allocation6 + $0x48] sm:$0xff]
    %v77 = vld [vmem:[#allocation6 + $0x50] sm:$0xff]
    %v78 = vld [vmem:[#allocation6 + $0x58] sm:$0xff]
    %v79 = vld [vmem:[#allocation6 + $0x60] sm:$0xff]
    %v80 = vld [vmem:[#allocation6 + $0x68] sm:$0xff]
    %v81 = vld [vmem:[#allocation6 + $0x70] sm:$0xff]
    %v82 = vld [vmem:[#allocation6 + $0x78] sm:$0xff]
    %83 = vmatprep.subr.mxu0 0.0
    %84 = vmatpush1.msra.mxu0 %v67
    %85 = vmatprep.subr.mxu0 0.0
    %86 = vmatpush1.msra.mxu0 %v68
    %87 = vmatprep.subr.mxu0 0.0
    %88 = vmatpush1.msra.mxu0 %v69
    %89 = vmatprep.subr.mxu0 0.0
    %90 = vmatpush1.msra.mxu0 %v70
    %91 = vmatprep.subr.mxu0 0.0
    %92 = vmatpush1.msra.mxu0 %v71
    %93 = vmatprep.subr.mxu0 0.0
    %94 = vmatpush1.msra.mxu0 %v72
    %95 = vmatprep.subr.mxu0 0.0
    %96 = vmatpush1.msra.mxu0 %v73
    %97 = vmatprep.subr.mxu0 0.0
    %98 = vmatpush1.msra.mxu0 %v74
    %99 = vmatprep.subr.mxu0 0.0
    %100 = vmatpush1.msra.mxu0 %v75
    %101 = vmatprep.subr.mxu0 0.0
    %102 = vmatpush1.msra.mxu0 %v76
    %103 = vmatprep.subr.mxu0 0.0
    %104 = vmatpush1.msra.mxu0 %v77
    %105 = vmatprep.subr.mxu0 0.0
    %106 = vmatpush1.msra.mxu0 %v78
    %107 = vmatprep.subr.mxu0 0.0
    %108 = vmatpush1.msra.mxu0 %v79
    %109 = vmatprep.subr.mxu0 0.0
    %110 = vmatpush1.msra.mxu0 %v80
    %111 = vmatprep.subr.mxu0 0.0
    %112 = vmatpush1.msra.mxu0 %v81
    %113 = vmatprep.subr.mxu0 0.0
    %114 = vmatpush1.msra.mxu0 %v82
    %115 = vmatprep.subr.mxu0 0.0
    %116 = vmatpush1.msra.mxu0 0.0
    %117 = vmatprep.subr.mxu0 0.0
    %118 = vmatpush1.msra.mxu0 0.0
    %119 = vmatprep.subr.mxu0 0.0
    %120 = vmatpush1.msra.mxu0 0.0
    %121 = vmatprep.subr.mxu0 0.0
    %122 = vmatpush1.msra.mxu0 0.0
    %123 = vmatprep.subr.mxu0 0.0
    %124 = vmatpush1.msra.mxu0 0.0
    %125 = vmatprep.subr.mxu0 0.0
    %126 = vmatpush1.msra.mxu0 0.0
    %127 = vmatprep.subr.mxu0 0.0
    %128 = vmatpush1.msra.mxu0 0.0
    %129 = vmatprep.subr.mxu0 0.0
    %130 = vmatpush1.msra.mxu0 0.0
    %131 = vmatprep.subr.mxu0 0.0
    %132 = vmatpush1.msra.mxu0 0.0
    %133 = vmatprep.subr.mxu0 0.0
    %134 = vmatpush1.msra.mxu0 0.0
    %135 = vmatprep.subr.mxu0 0.0
    %136 = vmatpush1.msra.mxu0 0.0
    %137 = vmatprep.subr.mxu0 0.0
    %138 = vmatpush1.msra.mxu0 0.0
    %139 = vmatprep.subr.mxu0 0.0
    %140 = vmatpush1.msra.mxu0 0.0
    %141 = vmatprep.subr.mxu0 0.0
    %142 = vmatpush1.msra.mxu0 0.0
    %143 = vmatprep.subr.mxu0 0.0
    %144 = vmatpush1.msra.mxu0 0.0
    %145 = vmatprep.subr.mxu0 0.0
    %146 = vmatpush1.msra.mxu0 0.0
    %147 = vmatprep.mubr.f32.mxu0 0.0
    %148 = vmatmul.mubr.f32.gmra.mrb[0].mxu0 %v66
    %v149 = vpop.f32.mrb[0].mxu0
    %v150 = vadd.f32 0.0, %v149
    %v151 = vpop.f32.mrb[0].mxu0
    %152 = vdwg.mxu0
    %v153 = vadd.f32 %v65, %v150
    %154 = vst [vmem:[#allocation2] sm:$0xff] %v153
    // Predicated region
    $region38: #{tpu_custom_call.1} parent=1 // pred_check
      %p155 = pneg %p60
    $region39: #{tpu_custom_call.1} parent=1 // pred_check_branch
      %157 = sbr.rel (%p155) target = $region41
    $region40: #{tpu_custom_call.1} parent=1 // pred_region
      %v158 = vld [vmem:[#allocation2] sm:$0xff]
      %v159 = vld [vmem:[%s2] sm:$0x1]
      %v161 = vlaneseq
      %v162 = vshrl.u32 %v161, 7
      %v163 = vsub.s32 0, %v162
      %v164 = vrot.slane %v159, %v163
      %v166 = vadd.f32 %v158, %v164
      %vm167 = vcmp.gt.f32.partialorder %v166, 20.0
      %v168 = vmin.f32 %v166, 20.0
      %v169 = vmul.f32 %v168, 1.442695
      %v170 = vpow.pop %v169
      %v171 = vadd.f32 %v170, 1.0
      %v172 = vlog2.pop %v171
      %v173 = vmul.f32 %v172, 0.6931472
      %v174 = vmul.f32 -0.5, %v170
      %v175 = vadd.f32 %v174, 1.0
      %v176 = vmul.f32 %v175, %v170
      %v177 = vand.u32 2147483647, %v170
      %vm178 = vcmp.lt.f32.partialorder %v177, 0.0004427343
      %v179 = vsel %vm178, %v176, %v173
      %v180 = vsel %vm167, %v166, %v179
      %v181 = vld [vmem:[#allocation8] sm:$0xff]
      %v182 = vld [vmem:[#allocation8 + $0x8] sm:$0xff]
      %v183 = vld [vmem:[#allocation8 + $0x10] sm:$0xff]
      %v184 = vld [vmem:[#allocation8 + $0x18] sm:$0xff]
      %v185 = vld [vmem:[#allocation8 + $0x20] sm:$0xff]
      %v186 = vld [vmem:[#allocation8 + $0x28] sm:$0xff]
      %v187 = vld [vmem:[#allocation8 + $0x30] sm:$0xff]
      %v188 = vld [vmem:[#allocation8 + $0x38] sm:$0xff]
      %v189 = vld [vmem:[#allocation8 + $0x40] sm:$0xff]
      %v190 = vld [vmem:[#allocation8 + $0x48] sm:$0xff]
      %v191 = vld [vmem:[#allocation8 + $0x50] sm:$0xff]
      %v192 = vld [vmem:[#allocation8 + $0x58] sm:$0xff]
      %v193 = vld [vmem:[#allocation8 + $0x60] sm:$0xff]
      %v194 = vld [vmem:[#allocation8 + $0x68] sm:$0xff]
      %v195 = vld [vmem:[#allocation8 + $0x70] sm:$0xff]
      %v196 = vld [vmem:[#allocation8 + $0x78] sm:$0xff]
      %v197 = vld [vmem:[%s4] sm:$0x1]
      %v199 = vlaneseq
      %v200 = vshrl.u32 %v199, 7
      %v201 = vsub.s32 0, %v200
      %v202 = vrot.slane %v197, %v201
      %204 = vmatprep.subr.mxu0 0.0
      %205 = vmatpush1.msra.mxu0 %v181
      %206 = vmatprep.subr.mxu0 0.0
      %207 = vmatpush1.msra.mxu0 %v182
      %208 = vmatprep.subr.mxu0 0.0
      %209 = vmatpush1.msra.mxu0 %v183
      %210 = vmatprep.subr.mxu0 0.0
      %211 = vmatpush1.msra.mxu0 %v184
      %212 = vmatprep.subr.mxu0 0.0
      %213 = vmatpush1.msra.mxu0 %v185
      %214 = vmatprep.subr.mxu0 0.0
      %215 = vmatpush1.msra.mxu0 %v186
      %216 = vmatprep.subr.mxu0 0.0
      %217 = vmatpush1.msra.mxu0 %v187
      %218 = vmatprep.subr.mxu0 0.0
      %219 = vmatpush1.msra.mxu0 %v188
      %220 = vmatprep.subr.mxu0 0.0
      %221 = vmatpush1.msra.mxu0 %v189
      %222 = vmatprep.subr.mxu0 0.0
      %223 = vmatpush1.msra.mxu0 %v190
      %224 = vmatprep.subr.mxu0 0.0
      %225 = vmatpush1.msra.mxu0 %v191
      %226 = vmatprep.subr.mxu0 0.0
      %227 = vmatpush1.msra.mxu0 %v192
      %228 = vmatprep.subr.mxu0 0.0
      %229 = vmatpush1.msra.mxu0 %v193
      %230 = vmatprep.subr.mxu0 0.0
      %231 = vmatpush1.msra.mxu0 %v194
      %232 = vmatprep.subr.mxu0 0.0
      %233 = vmatpush1.msra.mxu0 %v195
      %234 = vmatprep.subr.mxu0 0.0
      %235 = vmatpush1.msra.mxu0 %v196
      %236 = vmatprep.subr.mxu0 0.0
      %237 = vmatpush1.msra.mxu0 0.0
      %238 = vmatprep.subr.mxu0 0.0
      %239 = vmatpush1.msra.mxu0 0.0
      %240 = vmatprep.subr.mxu0 0.0
      %241 = vmatpush1.msra.mxu0 0.0
      %242 = vmatprep.subr.mxu0 0.0
      %243 = vmatpush1.msra.mxu0 0.0
      %244 = vmatprep.subr.mxu0 0.0
      %245 = vmatpush1.msra.mxu0 0.0
      %246 = vmatprep.subr.mxu0 0.0
      %247 = vmatpush1.msra.mxu0 0.0
      %248 = vmatprep.subr.mxu0 0.0
      %249 = vmatpush1.msra.mxu0 0.0
      %250 = vmatprep.subr.mxu0 0.0
      %251 = vmatpush1.msra.mxu0 0.0
      %252 = vmatprep.subr.mxu0 0.0
      %253 = vmatpush1.msra.mxu0 0.0
      %254 = vmatprep.subr.mxu0 0.0
      %255 = vmatpush1.msra.mxu0 0.0
      %256 = vmatprep.subr.mxu0 0.0
      %257 = vmatpush1.msra.mxu0 0.0
      %258 = vmatprep.subr.mxu0 0.0
      %259 = vmatpush1.msra.mxu0 0.0
      %260 = vmatprep.subr.mxu0 0.0
      %261 = vmatpush1.msra.mxu0 0.0
      %262 = vmatprep.subr.mxu0 0.0
      %263 = vmatpush1.msra.mxu0 0.0
      %264 = vmatprep.subr.mxu0 0.0
      %265 = vmatpush1.msra.mxu0 0.0
      %266 = vmatprep.subr.mxu0 0.0
      %267 = vmatpush1.msra.mxu0 0.0
      %268 = vmatprep.mubr.f32.mxu0 0.0
      %269 = vmatmul.mubr.f32.gmra.mrb[0].mxu0 %v180
      %v270 = vpop.f32.mrb[0].mxu0
      %v271 = vadd.f32 %v202, %v270
      %v272 = vpop.f32.mrb[0].mxu0
      %273 = vdwg.mxu0
      %274 = vst [vmem:[#allocation9] sm:$0xff] %v271
    $region41: #{tpu_custom_call.1} parent=1 // pred_fallthru
      _
    // Predicated region
    $region42: #{tpu_custom_call.1} parent=1 // pred_check
      _
    $region43: #{tpu_custom_call.1} parent=1 // pred_check_branch
      %276 = sbr.rel (0) target = $region45
    $region44: #{tpu_custom_call.1} parent=1 // pred_region
      %s278 = ssub.s32 128, 128
      %279 = vsyncadd [#allocation5], %s278
      %s281 = sshll.u32 [#allocation9], 4
      %s282 = int_to_ptr.vmem [resolvable:$true] %s281
      %284 = dma.vmem_to_hbm [thread:$0]  %s282, 128, %s5, [#allocation5]
    $region45: #{tpu_custom_call.1} parent=1 // pred_fallthru
      _
    // Predicated region
    $region46: #{tpu_custom_call.1} parent=1 // pred_check
      _
    $region47: #{tpu_custom_call.1} parent=1 // pred_check_branch
      %286 = sbr.rel (0) target = $region49
    $region48: #{tpu_custom_call.1} parent=1 // pred_region
      %287 = dma.done [#allocation5], 128
    $region49: #{tpu_custom_call.1} parent=1 // pred_fallthru
      _
    %288 = vsyncpa [#allocation4], 1
    %289 = vsyncpa [#allocation7], 1
    %290 = vsyncpa [#allocation5], 1

</llo_original>
